<compile_context>
chip_gen: v7x
topology: tpu7x:2x2x1
jax: 0.10.0
libtpu: 0.0.40
codegen_flags: <defaults>
</compile_context>

<pallas_src>
import numpy as np
import jax
import jax.numpy as jnp
from jax.experimental import pallas as pl
from jax.experimental.pallas import tpu as pltpu

LANE = 128  # TPU lane width; hidden (contraction) dims are padded to this


def _round_up(n, m):
    return ((n + m - 1) // m) * m


# ----------------------------------------------------------------------------
# MADE mask construction (identical to PyTorch MADE.update_masks with
# num_masks=1, natural_ordering=False, seed=0). Pure numpy glue, deterministic.
# masks[i] has shape (in_features_i, out_features_i) -> matches (in, out) weights.
# ----------------------------------------------------------------------------
def made_masks(nin, hidden_sizes, nout, seed=0):
    L = len(hidden_sizes)
    rng = np.random.RandomState(seed)
    m = {}
    m[-1] = rng.permutation(nin)
    for l in range(L):
        m[l] = rng.randint(m[l - 1].min(), nin - 1, size=hidden_sizes[l])
    masks = [m[l - 1][:, None] <= m[l][None, :] for l in range(L)]
    masks.append(m[L - 1][:, None] < m[-1][None, :])
    if nout > nin:
        k = int(nout / nin)
        masks[-1] = np.concatenate([masks[-1]] * k, axis=1)
    return [mk.astype(np.float32) for mk in masks]


# ----------------------------------------------------------------------------
# Pallas kernel: 3 mask-folded matmuls + leaky-relu(0.1) + sigmoid gating.
# x_ref: (tb, dim) f32; weights already mask-folded, hidden dims 128-padded,
# possibly bf16 (accumulation stays f32 via preferred_element_type).
# ----------------------------------------------------------------------------
def iaf_kernel(x_ref, w1_ref, b1_ref, w2_ref, b2_ref,
               ws_ref, bs_ref, wg_ref, bg_ref, z_ref):
    x = x_ref[...]                                        # (tb, dim) f32
    wdt = w1_ref.dtype                                    # f32 or bf16 MXU operand dtype

    # layer 1: masked linear (mask pre-folded, K = dim) + LeakyReLU(0.1)
    h1 = jnp.dot(x.astype(wdt), w1_ref[...],
                 preferred_element_type=jnp.float32) + b1_ref[...]
    h1 = jnp.maximum(h1, 0.1 * h1)

    # layer 2: masked linear + LeakyReLU(0.1)
    h2 = jnp.dot(h1.astype(wdt), w2_ref[...],
                 preferred_element_type=jnp.float32) + b2_ref[...]
    h2 = jnp.maximum(h2, 0.1 * h2)

    # layer 3: independent shift / scale heads (outputs stay at the real dim width)
    h2c = h2.astype(wdt)
    shift = jnp.dot(h2c, ws_ref[...], preferred_element_type=jnp.float32) + bs_ref[...]
    scale = jnp.dot(h2c, wg_ref[...], preferred_element_type=jnp.float32) + bg_ref[...]

    gate = jax.nn.sigmoid(scale)                          # EUP
    # z = x*gate + (1-gate)*shift  ==  shift + gate*(x - shift)
    z_ref[...] = shift + gate * (x - shift)


# ----------------------------------------------------------------------------
# Wrapper: batch-tiled 1-D grid, weights resident, narrow (B, dim) I/O.
# ----------------------------------------------------------------------------
def iaf_forward(x, kparams, *, tile_b=1024):
    x = x.astype(jnp.float32)
    B, dim = x.shape
    assert dim == kparams["dim"]

    # Sublane-aligned batch tile, large enough to amortize the ~0.35us/step
    # overhead; for small batches shrink it so the "parallel" grid has >= 2
    # steps and both v7x TensorCores get work (no effect on v5e/v6e).
    tb = min(tile_b, _round_up(B, 8))
    if pl.cdiv(B, tb) < 2 and B >= 16:
        tb = _round_up(pl.cdiv(B, 2), 8)
    grid = (pl.cdiv(B, tb),)

    w1, b1 = kparams["w1"], kparams["b1"]
    w2, b2 = kparams["w2"], kparams["b2"]
    ws, bs = kparams["w_shift"], kparams["b_shift"]
    wg, bg = kparams["w_scale"], kparams["b_scale"]
    h1p, h2p = w1.shape[1], w2.shape[1]

    def resident(a):  # whole array, constant block index -> stays in VMEM across steps
        return pl.BlockSpec(a.shape, lambda i: (0, 0))

    wbytes = sum(int(np.prod(a.shape)) * a.dtype.itemsize
                 for a in (w1, b1, w2, b2, ws, bs, wg, bg))
    cost = pl.CostEstimate(
        flops=2 * B * (dim * h1p + h1p * h2p + 2 * h2p * dim),
        transcendentals=B * dim,                      # sigmoid exp
        bytes_accessed=wbytes + 2 * B * dim * 4,      # params + x + z
    )

    z = pl.pallas_call(
        iaf_kernel,
        out_shape=jax.ShapeDtypeStruct((B, dim), jnp.float32),
        grid=grid,
        in_specs=[
            pl.BlockSpec((tb, dim), lambda i: (i, 0)),     # x: batch-tiled, lane width = dim
            resident(w1), resident(b1), resident(w2), resident(b2),
            resident(ws), resident(bs), resident(wg), resident(bg),
        ],
        out_specs=pl.BlockSpec((tb, dim), lambda i: (i, 0)),
        compiler_params=pltpu.CompilerParams(
            dimension_semantics=("parallel",),
            vmem_limit_bytes=32 * 1024 * 1024),
        cost_estimate=cost,
    )(x, w1, b1, w2, b2, ws, bs, wg, bg)
    return z


# ----------------------------------------------------------------------------
# Parameter init: PyTorch-Linear-style uniform(-1/sqrt(fan_in), +), weights (in, out).
# Returns (kernel params: mask-folded, head-split, hidden dims 128-padded,
# weights in `weight_dtype`) and (raw params: unfused f32, for the reference).
# ----------------------------------------------------------------------------
def init_iaf_params(dim, h_sizes, key, weight_dtype=jnp.bfloat16):
    nin, nout = dim, 2 * dim
    sizes = [nin] + list(h_sizes) + [nout]
    masks = made_masks(nin, list(h_sizes), nout, seed=0)

    raw = {}
    for i, (fi, fo) in enumerate(zip(sizes, sizes[1:]), start=1):
        key, kw, kb = jax.random.split(key, 3)
        bound = 1.0 / np.sqrt(fi)
        raw[f"w{i}"] = jax.random.uniform(kw, (fi, fo), jnp.float32,
                                          minval=-bound, maxval=bound)
        raw[f"b{i}"] = jax.random.uniform(kb, (1, fo), jnp.float32,
                                          minval=-bound, maxval=bound)
        raw[f"m{i}"] = jnp.asarray(masks[i - 1])

    h1p = _round_up(h_sizes[0], LANE)
    h2p = _round_up(h_sizes[1], LANE)

    def padded(a, rows, cols):
        out = np.zeros((rows, cols), np.float32)
        a = np.asarray(a, np.float32)
        out[:a.shape[0], :a.shape[1]] = a
        return out

    w1f = np.asarray(raw["m1"] * raw["w1"])   # (dim, h1)
    w2f = np.asarray(raw["m2"] * raw["w2"])   # (h1, h2)
    w3f = np.asarray(raw["m3"] * raw["w3"])   # (h2, 2*dim)
    b1, b2, b3 = (np.asarray(raw["b1"]), np.asarray(raw["b2"]), np.asarray(raw["b3"]))

    # Padded hidden lanes are exact zeros everywhere (zero weight cols/rows,
    # zero bias), so they never leak into the dim-wide shift/scale/z outputs.
    kparams = {
        "w1": jnp.asarray(padded(w1f, dim, h1p), weight_dtype),   # K = dim (no padded rows)
        "b1": jnp.asarray(padded(b1, 1, h1p)),                    # biases stay f32
        "w2": jnp.asarray(padded(w2f, h1p, h2p), weight_dtype),
        "b2": jnp.asarray(padded(b2, 1, h2p)),
        "w_shift": jnp.asarray(padded(w3f[:, :dim], h2p, dim), weight_dtype),
        "b_shift": jnp.asarray(b3[:, :dim].astype(np.float32)),
        "w_scale": jnp.asarray(padded(w3f[:, dim:], h2p, dim), weight_dtype),
        "b_scale": jnp.asarray(b3[:, dim:].astype(np.float32)),
        "dim": dim,
    }
    return kparams, raw


# Pure-JAX reference (unfused, unpadded, f32) for correctness checking.
def iaf_reference(x, p):
    def lrelu(v):
        return jnp.where(v > 0, v, 0.1 * v)
    h1 = lrelu(x @ (p["m1"] * p["w1"]) + p["b1"])
    h2 = lrelu(h1 @ (p["m2"] * p["w2"]) + p["b2"])
    out = h2 @ (p["m3"] * p["w3"]) + p["b3"]
    dim = x.shape[-1]
    shift, scale = out[:, :dim], out[:, dim:]
    gate = jax.nn.sigmoid(scale)
    return x * gate + (1.0 - gate) * shift


if __name__ == "__main__":
    dim = 16            # flow dimensionality
    h_sizes = [75, 75]  # MADE hidden sizes (module default)
    batch = 64          # small demo batch; tiling logic splits it into 2 grid steps

    key = jax.random.PRNGKey(0)
    key, kx = jax.random.split(key)
    x = jax.random.normal(kx, (batch, dim), dtype=jnp.float32)

    # f32 weights: tight check against the pure-JAX reference.
    kparams_f32, raw = init_iaf_params(dim, h_sizes, key, weight_dtype=jnp.float32)
    z = jax.block_until_ready(iaf_forward(x, kparams_f32))
    z_ref = iaf_reference(x, raw)
    assert z.shape == (batch, dim)
    assert jnp.allclose(z, z_ref, atol=1e-5, rtol=1e-5), "f32 mismatch vs JAX reference"

    # default bf16 weights (MXU-native on v5e/v6e/v7x, halves weight DMA);
    # biases / activations / gating stay f32.
    kparams_bf16, _ = init_iaf_params(dim, h_sizes, key)
    z_bf16 = jax.block_until_ready(iaf_forward(x, kparams_bf16))
    assert jnp.allclose(z_bf16, z_ref, atol=5e-2, rtol=5e-2), "bf16 mismatch vs JAX reference"

    # TODO(synk): log_det() (sum of log(gate + 1e-8) over the cached gate) is a
    # post-forward reduction, not part of forward(), so it is not emitted here.
    print("KERNEL_OK")
</pallas_src>

<mosaic_0001>
module attributes {stable_mosaic.version = 11 : i64} {
  func.func @iaf_kernel(%arg0: i32, %arg1: memref<32x16xf32, #tpu.memory_space<vmem>>, %arg2: memref<16x128xf32, #tpu.memory_space<vmem>>, %arg3: memref<1x128xf32, #tpu.memory_space<vmem>>, %arg4: memref<128x128xf32, #tpu.memory_space<vmem>>, %arg5: memref<1x128xf32, #tpu.memory_space<vmem>>, %arg6: memref<128x16xf32, #tpu.memory_space<vmem>>, %arg7: memref<1x16xf32, #tpu.memory_space<vmem>>, %arg8: memref<128x16xf32, #tpu.memory_space<vmem>>, %arg9: memref<1x16xf32, #tpu.memory_space<vmem>>, %arg10: memref<32x16xf32, #tpu.memory_space<vmem>>) attributes {dimension_semantics = [#tpu.dimension_semantics<parallel>], iteration_bounds = array<i64: 2>, scalar_prefetch = 0 : i64, scratch_operands = 0 : i64, tpu.core_type = #tpu.core_type<tc>, window_params = [{transform_indices = @transform_0, window_bounds = array<i64: 32, 16>}, {pipeline_mode = #tpu.pipeline_mode<synchronous>, transform_indices = @transform_1, window_bounds = array<i64: 16, 128>}, {pipeline_mode = #tpu.pipeline_mode<synchronous>, transform_indices = @transform_2, window_bounds = array<i64: 1, 128>}, {pipeline_mode = #tpu.pipeline_mode<synchronous>, transform_indices = @transform_3, window_bounds = array<i64: 128, 128>}, {pipeline_mode = #tpu.pipeline_mode<synchronous>, transform_indices = @transform_4, window_bounds = array<i64: 1, 128>}, {pipeline_mode = #tpu.pipeline_mode<synchronous>, transform_indices = @transform_5, window_bounds = array<i64: 128, 16>}, {pipeline_mode = #tpu.pipeline_mode<synchronous>, transform_indices = @transform_6, window_bounds = array<i64: 1, 16>}, {pipeline_mode = #tpu.pipeline_mode<synchronous>, transform_indices = @transform_7, window_bounds = array<i64: 128, 16>}, {pipeline_mode = #tpu.pipeline_mode<synchronous>, transform_indices = @transform_8, window_bounds = array<i64: 1, 16>}, {transform_indices = @transform_9, window_bounds = array<i64: 32, 16>}]} {
    %c0 = arith.constant 0 : index
    %c0_0 = arith.constant 0 : index
    %0 = vector.load %arg1[%c0, %c0_0] : memref<32x16xf32, #tpu.memory_space<vmem>>, vector<32x16xf32>
    %c0_1 = arith.constant 0 : index
    %c0_2 = arith.constant 0 : index
    %1 = vector.load %arg2[%c0_1, %c0_2] : memref<16x128xf32, #tpu.memory_space<vmem>>, vector<16x128xf32>
    %cst = arith.constant dense<0.000000e+00> : vector<32x128xf32>
    %2 = tpu.matmul %0, %1, %cst {dimension_numbers = #tpu.dot_dimension_numbers<[1], [0], [0], [1], [0, 0, 1, 1], [], []>} : vector<32x16xf32>, vector<16x128xf32>, vector<32x128xf32> -> vector<32x128xf32>
    %c0_3 = arith.constant 0 : index
    %c0_4 = arith.constant 0 : index
    %3 = vector.load %arg3[%c0_3, %c0_4] : memref<1x128xf32, #tpu.memory_space<vmem>>, vector<1x128xf32>
    %4 = vector.broadcast %3 : vector<1x128xf32> to vector<32x128xf32>
    %5 = arith.addf %2, %4 : vector<32x128xf32>
    %cst_5 = arith.constant 1.000000e-01 : f32
    %6 = vector.broadcast %cst_5 : f32 to vector<32x128xf32>
    %7 = arith.mulf %6, %5 : vector<32x128xf32>
    %8 = arith.maximumf %5, %7 : vector<32x128xf32>
    %c0_6 = arith.constant 0 : index
    %c0_7 = arith.constant 0 : index
    %9 = vector.load %arg4[%c0_6, %c0_7] : memref<128x128xf32, #tpu.memory_space<vmem>>, vector<128x128xf32>
    %cst_8 = arith.constant dense<0.000000e+00> : vector<32x128xf32>
    %10 = tpu.matmul %8, %9, %cst_8 {dimension_numbers = #tpu.dot_dimension_numbers<[1], [0], [0], [1], [0, 0, 1, 1], [], []>} : vector<32x128xf32>, vector<128x128xf32>, vector<32x128xf32> -> vector<32x128xf32>
    %c0_9 = arith.constant 0 : index
    %c0_10 = arith.constant 0 : index
    %11 = vector.load %arg5[%c0_9, %c0_10] : memref<1x128xf32, #tpu.memory_space<vmem>>, vector<1x128xf32>
    %12 = vector.broadcast %11 : vector<1x128xf32> to vector<32x128xf32>
    %13 = arith.addf %10, %12 : vector<32x128xf32>
    %cst_11 = arith.constant 1.000000e-01 : f32
    %14 = vector.broadcast %cst_11 : f32 to vector<32x128xf32>
    %15 = arith.mulf %14, %13 : vector<32x128xf32>
    %16 = arith.maximumf %13, %15 : vector<32x128xf32>
    %c0_12 = arith.constant 0 : index
    %c0_13 = arith.constant 0 : index
    %17 = vector.load %arg6[%c0_12, %c0_13] : memref<128x16xf32, #tpu.memory_space<vmem>>, vector<128x16xf32>
    %cst_14 = arith.constant dense<0.000000e+00> : vector<32x16xf32>
    %18 = tpu.matmul %16, %17, %cst_14 {dimension_numbers = #tpu.dot_dimension_numbers<[1], [0], [0], [1], [0, 0, 1, 1], [], []>} : vector<32x128xf32>, vector<128x16xf32>, vector<32x16xf32> -> vector<32x16xf32>
    %c0_15 = arith.constant 0 : index
    %c0_16 = arith.constant 0 : index
    %19 = vector.load %arg7[%c0_15, %c0_16] : memref<1x16xf32, #tpu.memory_space<vmem>>, vector<1x16xf32>
    %20 = vector.broadcast %19 : vector<1x16xf32> to vector<32x16xf32>
    %21 = arith.addf %18, %20 : vector<32x16xf32>
    %c0_17 = arith.constant 0 : index
    %c0_18 = arith.constant 0 : index
    %22 = vector.load %arg8[%c0_17, %c0_18] : memref<128x16xf32, #tpu.memory_space<vmem>>, vector<128x16xf32>
    %cst_19 = arith.constant dense<0.000000e+00> : vector<32x16xf32>
    %23 = tpu.matmul %16, %22, %cst_19 {dimension_numbers = #tpu.dot_dimension_numbers<[1], [0], [0], [1], [0, 0, 1, 1], [], []>} : vector<32x128xf32>, vector<128x16xf32>, vector<32x16xf32> -> vector<32x16xf32>
    %c0_20 = arith.constant 0 : index
    %c0_21 = arith.constant 0 : index
    %24 = vector.load %arg9[%c0_20, %c0_21] : memref<1x16xf32, #tpu.memory_space<vmem>>, vector<1x16xf32>
    %25 = vector.broadcast %24 : vector<1x16xf32> to vector<32x16xf32>
    %26 = arith.addf %23, %25 : vector<32x16xf32>
    %27 = arith.negf %26 : vector<32x16xf32>
    %28 = math.exp %27 : vector<32x16xf32>
    %cst_22 = arith.constant 1.000000e+00 : f32
    %29 = vector.broadcast %cst_22 : f32 to vector<32x16xf32>
    %30 = arith.addf %29, %28 : vector<32x16xf32>
    %31 = arith.divf %29, %30 : vector<32x16xf32>
    %32 = arith.subf %0, %21 : vector<32x16xf32>
    %33 = arith.mulf %31, %32 : vector<32x16xf32>
    %34 = arith.addf %21, %33 : vector<32x16xf32>
    %c0_23 = arith.constant 0 : index
    %c0_24 = arith.constant 0 : index
    %35 = vector.load %arg10[%c0_23, %c0_24] : memref<32x16xf32, #tpu.memory_space<vmem>>, vector<32x16xf32>
    tpu.vector_store %arg10[%c0_23, %c0_24], %34 {strides = array<i32>} : memref<32x16xf32, #tpu.memory_space<vmem>>, vector<32x16xf32>,
    return
  }
  func.func @transform_0(%arg0: i32) -> (i32, i32) {
    %c0_i32 = arith.constant 0 : i32
    %c0_i32_0 = arith.constant 0 : i32
    return %arg0, %c0_i32 : i32, i32
  }
  func.func @transform_1(%arg0: i32) -> (i32, i32) {
    %c0_i32 = arith.constant 0 : i32
    %c0_i32_0 = arith.constant 0 : i32
    %c0_i32_1 = arith.constant 0 : i32
    return %c0_i32, %c0_i32_0 : i32, i32
  }
  func.func @transform_2(%arg0: i32) -> (i32, i32) {
    %c0_i32 = arith.constant 0 : i32
    %c0_i32_0 = arith.constant 0 : i32
    %c0_i32_1 = arith.constant 0 : i32
    return %c0_i32, %c0_i32_0 : i32, i32
  }
  func.func @transform_3(%arg0: i32) -> (i32, i32) {
    %c0_i32 = arith.constant 0 : i32
    %c0_i32_0 = arith.constant 0 : i32
    %c0_i32_1 = arith.constant 0 : i32
    return %c0_i32, %c0_i32_0 : i32, i32
  }
  func.func @transform_4(%arg0: i32) -> (i32, i32) {
    %c0_i32 = arith.constant 0 : i32
    %c0_i32_0 = arith.constant 0 : i32
    %c0_i32_1 = arith.constant 0 : i32
    return %c0_i32, %c0_i32_0 : i32, i32
  }
  func.func @transform_5(%arg0: i32) -> (i32, i32) {
    %c0_i32 = arith.constant 0 : i32
    %c0_i32_0 = arith.constant 0 : i32
    %c0_i32_1 = arith.constant 0 : i32
    return %c0_i32, %c0_i32_0 : i32, i32
  }
  func.func @transform_6(%arg0: i32) -> (i32, i32) {
    %c0_i32 = arith.constant 0 : i32
    %c0_i32_0 = arith.constant 0 : i32
    %c0_i32_1 = arith.constant 0 : i32
    return %c0_i32, %c0_i32_0 : i32, i32
  }
  func.func @transform_7(%arg0: i32) -> (i32, i32) {
    %c0_i32 = arith.constant 0 : i32
    %c0_i32_0 = arith.constant 0 : i32
    %c0_i32_1 = arith.constant 0 : i32
    return %c0_i32, %c0_i32_0 : i32, i32
  }
  func.func @transform_8(%arg0: i32) -> (i32, i32) {
    %c0_i32 = arith.constant 0 : i32
    %c0_i32_0 = arith.constant 0 : i32
    %c0_i32_1 = arith.constant 0 : i32
    return %c0_i32, %c0_i32_0 : i32, i32
  }
  func.func @transform_9(%arg0: i32) -> (i32, i32) {
    %c0_i32 = arith.constant 0 : i32
    %c0_i32_0 = arith.constant 0 : i32
    return %arg0, %c0_i32 : i32, i32
  }
}

</mosaic_0001>

<llo_original>
// kernel: tpu_custom_call.1
$region0: #{tpu_custom_call.1}
  #allocation0 [shape = 'u32[]', space=smem, size = 0x4, offset = 0x4, fixed_abs, tag = 'smem constant byte address 0x4 - core index']
  #allocation1 [shape = 'u32[144,128]{1,0:T(1,128)}', space=vmem, size = 0x12000, scoped, tag = 'internal scratch']
  %s0 = inlined_call_operand.vmem [shape: f32[64,16], index: 0, kind: input, shape index: {}]
  %s1 = inlined_call_operand.vmem [shape: f32[16,128], index: 1, kind: input, shape index: {}]
  %s2 = inlined_call_operand.vmem [shape: f32[1,128], index: 2, kind: input, shape index: {}]
  %s3 = inlined_call_operand.vmem [shape: f32[128,128], index: 3, kind: input, shape index: {}]
  %s4 = inlined_call_operand.vmem [shape: f32[1,128], index: 4, kind: input, shape index: {}]
  %s5 = inlined_call_operand.vmem [shape: f32[128,16], index: 5, kind: input, shape index: {}]
  %s6 = inlined_call_operand.vmem [shape: f32[1,16], index: 6, kind: input, shape index: {}]
  %s7 = inlined_call_operand.vmem [shape: f32[128,16], index: 7, kind: input, shape index: {}]
  %s8 = inlined_call_operand.vmem [shape: f32[1,16], index: 8, kind: input, shape index: {}]
  %s9 = inlined_call_operand.vmem [shape: f32[64,16], index: 9, kind: output, shape index: {}]
  %s10 = sld [smem:[#allocation0]]
  $region69: #{tpu_custom_call.1} parent=0
    _
  %s12 = ssub.s32 1, %s10
  %s13 = scalar_select 0, %s12, %s10
  loop: start=0, step=1, limit=4
  $region2: #{tpu_custom_call.1} parent=0 // loop_pre_header
    _
  $region3: #{tpu_custom_call.1} parent=0 // loop_header
    %s15 = sphi 0, %s19
    %p16 = scmp.ge.s32.totalorder %s15, 4
    %s25 = sphi 0, %s27
    %s28 = sphi 0, %s25
    %s29 = sphi 0, %s28
    %s45 = sphi 0, %s29
    %s49 = sphi 0, %s49
    %s51 = sphi 0, %s49
    %s52 = sphi 0, %s51
    %s66 = sphi 0, %s52
    %s70 = sphi 0, %s70
    %s72 = sphi 0, %s70
    %s73 = sphi 0, %s72
    %s87 = sphi 0, %s73
    %s91 = sphi 0, %s91
    %s93 = sphi 0, %s91
    %s94 = sphi 0, %s93
    %s108 = sphi 0, %s94
    %s112 = sphi 0, %s112
    %s114 = sphi 0, %s112
    %s115 = sphi 0, %s114
    %s129 = sphi 0, %s115
    %s133 = sphi 0, %s133
    %s135 = sphi 0, %s133
    %s136 = sphi 0, %s135
    %s150 = sphi 0, %s136
    %s154 = sphi 0, %s154
    %s156 = sphi 0, %s154
    %s157 = sphi 0, %s156
    %s171 = sphi 0, %s157
    %s175 = sphi 0, %s175
    %s177 = sphi 0, %s175
    %s178 = sphi 0, %s177
    %s192 = sphi 0, %s178
    %s196 = sphi 0, %s196
    %s198 = sphi 0, %s196
    %s199 = sphi 0, %s198
    %s213 = sphi 0, %s199
    %s219 = sphi 0, %s221
    %s222 = sphi 0, %s219
    %s223 = sphi 0, %s222
    %s239 = sphi 0, %s223
  $region4: #{tpu_custom_call.1} parent=0 // loop_header_branch
    %18 = sbr.rel (%p16) target = $region8
  $region5: #{tpu_custom_call.1} parent=0 // loop_body
    %s20 = ssub.s32 %s15, 1
    %s21 = ssub.s32 %s15, 2
    %s22 = sadd.s32 %s15, 1
    %s23 = ssub.s32 %s15, %s22
    %p24 = scmp.eq.s32.totalorder %s23, 0
    %s26 = sadd.s32 %s25, 1
    %s27 = scalar_select %p24, %s25, %s26
    %p30 = pneg %p24
    %p31 = scmp.eq.s32.totalorder %s15, 1
    %p32 = por %p30, %p31
    %p33 = scmp.ne.s32.totalorder %s25, %s28
    %p34 = scmp.eq.s32.totalorder %s15, 0
    %p35 = por %p33, %p34
    %p36 = scmp.ne.s32.totalorder %s25, %s28
    %p37 = scmp.eq.s32.totalorder %s20, 1
    %p38 = por %p36, %p37
    %p39 = scmp.ne.s32.totalorder %s28, %s29
    %p40 = scmp.eq.s32.totalorder %s20, 0
    %p41 = por %p39, %p40
    %p42 = scmp.ne.s32.totalorder %s28, %s29
    %p43 = scmp.eq.s32.totalorder %s21, 1
    %p44 = por %p42, %p43
    %p46 = scmp.ne.s32.totalorder %s29, %s45
    %p47 = scmp.eq.s32.totalorder %s21, 0
    %p48 = por %p46, %p47
    %s50 = sadd.s32 %s49, 1
    %p53 = scmp.eq.s32.totalorder %s15, 1
    %p54 = scmp.ne.s32.totalorder %s49, %s51
    %p55 = scmp.eq.s32.totalorder %s15, 0
    %p56 = por %p54, %p55
    %p57 = scmp.ne.s32.totalorder %s49, %s51
    %p58 = scmp.eq.s32.totalorder %s20, 1
    %p59 = por %p57, %p58
    %p60 = scmp.ne.s32.totalorder %s51, %s52
    %p61 = scmp.eq.s32.totalorder %s20, 0
    %p62 = por %p60, %p61
    %p63 = scmp.ne.s32.totalorder %s51, %s52
    %p64 = scmp.eq.s32.totalorder %s21, 1
    %p65 = por %p63, %p64
    %p67 = scmp.ne.s32.totalorder %s52, %s66
    %p68 = scmp.eq.s32.totalorder %s21, 0
    %p69 = por %p67, %p68
    %s71 = sadd.s32 %s70, 1
    %p74 = scmp.eq.s32.totalorder %s15, 1
    %p75 = scmp.ne.s32.totalorder %s70, %s72
    %p76 = scmp.eq.s32.totalorder %s15, 0
    %p77 = por %p75, %p76
    %p78 = scmp.ne.s32.totalorder %s70, %s72
    %p79 = scmp.eq.s32.totalorder %s20, 1
    %p80 = por %p78, %p79
    %p81 = scmp.ne.s32.totalorder %s72, %s73
    %p82 = scmp.eq.s32.totalorder %s20, 0
    %p83 = por %p81, %p82
    %p84 = scmp.ne.s32.totalorder %s72, %s73
    %p85 = scmp.eq.s32.totalorder %s21, 1
    %p86 = por %p84, %p85
    %p88 = scmp.ne.s32.totalorder %s73, %s87
    %p89 = scmp.eq.s32.totalorder %s21, 0
    %p90 = por %p88, %p89
    %s92 = sadd.s32 %s91, 1
    %p95 = scmp.eq.s32.totalorder %s15, 1
    %p96 = scmp.ne.s32.totalorder %s91, %s93
    %p97 = scmp.eq.s32.totalorder %s15, 0
    %p98 = por %p96, %p97
    %p99 = scmp.ne.s32.totalorder %s91, %s93
    %p100 = scmp.eq.s32.totalorder %s20, 1
    %p101 = por %p99, %p100
    %p102 = scmp.ne.s32.totalorder %s93, %s94
    %p103 = scmp.eq.s32.totalorder %s20, 0
    %p104 = por %p102, %p103
    %p105 = scmp.ne.s32.totalorder %s93, %s94
    %p106 = scmp.eq.s32.totalorder %s21, 1
    %p107 = por %p105, %p106
    %p109 = scmp.ne.s32.totalorder %s94, %s108
    %p110 = scmp.eq.s32.totalorder %s21, 0
    %p111 = por %p109, %p110
    %s113 = sadd.s32 %s112, 1
    %p116 = scmp.eq.s32.totalorder %s15, 1
    %p117 = scmp.ne.s32.totalorder %s112, %s114
    %p118 = scmp.eq.s32.totalorder %s15, 0
    %p119 = por %p117, %p118
    %p120 = scmp.ne.s32.totalorder %s112, %s114
    %p121 = scmp.eq.s32.totalorder %s20, 1
    %p122 = por %p120, %p121
    %p123 = scmp.ne.s32.totalorder %s114, %s115
    %p124 = scmp.eq.s32.totalorder %s20, 0
    %p125 = por %p123, %p124
    %p126 = scmp.ne.s32.totalorder %s114, %s115
    %p127 = scmp.eq.s32.totalorder %s21, 1
    %p128 = por %p126, %p127
    %p130 = scmp.ne.s32.totalorder %s115, %s129
    %p131 = scmp.eq.s32.totalorder %s21, 0
    %p132 = por %p130, %p131
    %s134 = sadd.s32 %s133, 1
    %p137 = scmp.eq.s32.totalorder %s15, 1
    %p138 = scmp.ne.s32.totalorder %s133, %s135
    %p139 = scmp.eq.s32.totalorder %s15, 0
    %p140 = por %p138, %p139
    %p141 = scmp.ne.s32.totalorder %s133, %s135
    %p142 = scmp.eq.s32.totalorder %s20, 1
    %p143 = por %p141, %p142
    %p144 = scmp.ne.s32.totalorder %s135, %s136
    %p145 = scmp.eq.s32.totalorder %s20, 0
    %p146 = por %p144, %p145
    %p147 = scmp.ne.s32.totalorder %s135, %s136
    %p148 = scmp.eq.s32.totalorder %s21, 1
    %p149 = por %p147, %p148
    %p151 = scmp.ne.s32.totalorder %s136, %s150
    %p152 = scmp.eq.s32.totalorder %s21, 0
    %p153 = por %p151, %p152
    %s155 = sadd.s32 %s154, 1
    %p158 = scmp.eq.s32.totalorder %s15, 1
    %p159 = scmp.ne.s32.totalorder %s154, %s156
    %p160 = scmp.eq.s32.totalorder %s15, 0
    %p161 = por %p159, %p160
    %p162 = scmp.ne.s32.totalorder %s154, %s156
    %p163 = scmp.eq.s32.totalorder %s20, 1
    %p164 = por %p162, %p163
    %p165 = scmp.ne.s32.totalorder %s156, %s157
    %p166 = scmp.eq.s32.totalorder %s20, 0
    %p167 = por %p165, %p166
    %p168 = scmp.ne.s32.totalorder %s156, %s157
    %p169 = scmp.eq.s32.totalorder %s21, 1
    %p170 = por %p168, %p169
    %p172 = scmp.ne.s32.totalorder %s157, %s171
    %p173 = scmp.eq.s32.totalorder %s21, 0
    %p174 = por %p172, %p173
    %s176 = sadd.s32 %s175, 1
    %p179 = scmp.eq.s32.totalorder %s15, 1
    %p180 = scmp.ne.s32.totalorder %s175, %s177
    %p181 = scmp.eq.s32.totalorder %s15, 0
    %p182 = por %p180, %p181
    %p183 = scmp.ne.s32.totalorder %s175, %s177
    %p184 = scmp.eq.s32.totalorder %s20, 1
    %p185 = por %p183, %p184
    %p186 = scmp.ne.s32.totalorder %s177, %s178
    %p187 = scmp.eq.s32.totalorder %s20, 0
    %p188 = por %p186, %p187
    %p189 = scmp.ne.s32.totalorder %s177, %s178
    %p190 = scmp.eq.s32.totalorder %s21, 1
    %p191 = por %p189, %p190
    %p193 = scmp.ne.s32.totalorder %s178, %s192
    %p194 = scmp.eq.s32.totalorder %s21, 0
    %p195 = por %p193, %p194
    %s197 = sadd.s32 %s196, 1
    %p200 = scmp.eq.s32.totalorder %s15, 1
    %p201 = scmp.ne.s32.totalorder %s196, %s198
    %p202 = scmp.eq.s32.totalorder %s15, 0
    %p203 = por %p201, %p202
    %p204 = scmp.ne.s32.totalorder %s196, %s198
    %p205 = scmp.eq.s32.totalorder %s20, 1
    %p206 = por %p204, %p205
    %p207 = scmp.ne.s32.totalorder %s198, %s199
    %p208 = scmp.eq.s32.totalorder %s20, 0
    %p209 = por %p207, %p208
    %p210 = scmp.ne.s32.totalorder %s198, %s199
    %p211 = scmp.eq.s32.totalorder %s21, 1
    %p212 = por %p210, %p211
    %p214 = scmp.ne.s32.totalorder %s199, %s213
    %p215 = scmp.eq.s32.totalorder %s21, 0
    %p216 = por %p214, %p215
    %s217 = ssub.s32 %s15, %s22
    %p218 = scmp.eq.s32.totalorder %s217, 0
    %s220 = sadd.s32 %s219, 1
    %s221 = scalar_select %p218, %s219, %s220
    %p224 = pneg %p218
    %p225 = scmp.eq.s32.totalorder %s15, 1
    %p226 = por %p224, %p225
    %p227 = scmp.ne.s32.totalorder %s219, %s222
    %p228 = scmp.eq.s32.totalorder %s15, 0
    %p229 = por %p227, %p228
    %p230 = scmp.ne.s32.totalorder %s219, %s222
    %p231 = scmp.eq.s32.totalorder %s20, 1
    %p232 = por %p230, %p231
    %p233 = scmp.ne.s32.totalorder %s222, %s223
    %p234 = scmp.eq.s32.totalorder %s20, 0
    %p235 = por %p233, %p234
    %p236 = scmp.ne.s32.totalorder %s222, %s223
    %p237 = scmp.eq.s32.totalorder %s21, 1
    %p238 = por %p236, %p237
    %p240 = scmp.ne.s32.totalorder %s223, %s239
    %p241 = scmp.eq.s32.totalorder %s21, 0
    %p242 = por %p240, %p241
    %p243 = scmp.le.s32.totalorder 1, %s15
    %p244 = scmp.lt.s32.totalorder %s15, 3
    %p245 = pnand %p243, %p244
    %p246 = pneg %p245
    // Predicated region
    $region9: #{tpu_custom_call.1} parent=5 // pred_check
      _
    $region10: #{tpu_custom_call.1} parent=5 // pred_check_branch
      %248 = sbr.rel (%p245) target = $region12
    $region11: #{tpu_custom_call.1} parent=5 // pred_region
      %s249 = ssub.s32 %s15, 1
      // Predicated region
      $region13: #{tpu_custom_call.1} parent=11 // pred_check
        %p250 = pneg %p62
      $region14: #{tpu_custom_call.1} parent=11 // pred_check_branch
        %252 = sbr.rel (%p250) target = $region16
      $region15: #{tpu_custom_call.1} parent=11 // pred_region
        _
      $region16: #{tpu_custom_call.1} parent=11 // pred_fallthru
        _
      // Predicated region
      $region17: #{tpu_custom_call.1} parent=11 // pred_check
        %p253 = pneg %p83
      $region18: #{tpu_custom_call.1} parent=11 // pred_check_branch
        %255 = sbr.rel (%p253) target = $region20
      $region19: #{tpu_custom_call.1} parent=11 // pred_region
        _
      $region20: #{tpu_custom_call.1} parent=11 // pred_fallthru
        _
      // Predicated region
      $region21: #{tpu_custom_call.1} parent=11 // pred_check
        %p256 = pneg %p104
      $region22: #{tpu_custom_call.1} parent=11 // pred_check_branch
        %258 = sbr.rel (%p256) target = $region24
      $region23: #{tpu_custom_call.1} parent=11 // pred_region
        _
      $region24: #{tpu_custom_call.1} parent=11 // pred_fallthru
        _
      // Predicated region
      $region25: #{tpu_custom_call.1} parent=11 // pred_check
        %p259 = pneg %p125
      $region26: #{tpu_custom_call.1} parent=11 // pred_check_branch
        %261 = sbr.rel (%p259) target = $region28
      $region27: #{tpu_custom_call.1} parent=11 // pred_region
        _
      $region28: #{tpu_custom_call.1} parent=11 // pred_fallthru
        _
      // Predicated region
      $region29: #{tpu_custom_call.1} parent=11 // pred_check
        %p262 = pneg %p146
      $region30: #{tpu_custom_call.1} parent=11 // pred_check_branch
        %264 = sbr.rel (%p262) target = $region32
      $region31: #{tpu_custom_call.1} parent=11 // pred_region
        _
      $region32: #{tpu_custom_call.1} parent=11 // pred_fallthru
        _
      // Predicated region
      $region33: #{tpu_custom_call.1} parent=11 // pred_check
        %p265 = pneg %p167
      $region34: #{tpu_custom_call.1} parent=11 // pred_check_branch
        %267 = sbr.rel (%p265) target = $region36
      $region35: #{tpu_custom_call.1} parent=11 // pred_region
        _
      $region36: #{tpu_custom_call.1} parent=11 // pred_fallthru
        _
      // Predicated region
      $region37: #{tpu_custom_call.1} parent=11 // pred_check
        %p268 = pneg %p188
      $region38: #{tpu_custom_call.1} parent=11 // pred_check_branch
        %270 = sbr.rel (%p268) target = $region40
      $region39: #{tpu_custom_call.1} parent=11 // pred_region
        _
      $region40: #{tpu_custom_call.1} parent=11 // pred_fallthru
        _
      // Predicated region
      $region41: #{tpu_custom_call.1} parent=11 // pred_check
        %p271 = pneg %p209
      $region42: #{tpu_custom_call.1} parent=11 // pred_check_branch
        %273 = sbr.rel (%p271) target = $region44
      $region43: #{tpu_custom_call.1} parent=11 // pred_region
        _
      $region44: #{tpu_custom_call.1} parent=11 // pred_fallthru
        _
    $region12: #{tpu_custom_call.1} parent=5 // pred_fallthru
      _
    %p274 = scmp.lt.s32.totalorder %s15, 2
    // Predicated region
    $region45: #{tpu_custom_call.1} parent=5 // pred_check
      %p275 = pneg %p274
    $region46: #{tpu_custom_call.1} parent=5 // pred_check_branch
      %277 = sbr.rel (%p275) target = $region48
    $region47: #{tpu_custom_call.1} parent=5 // pred_region
      // Predicated region
      $region49: #{tpu_custom_call.1} parent=47 // pred_check
        %p278 = pneg %p35
      $region50: #{tpu_custom_call.1} parent=47 // pred_check_branch
        %280 = sbr.rel (%p278) target = $region52
      $region51: #{tpu_custom_call.1} parent=47 // pred_region
        %s281 = smul.u32 4, %s15
        %p282 = scmp.lt.s32.totalorder %s281, 7
        %s283 = scalar_select %p282, %s281, 7
        %s284 = smul.addr %s283, 8
        %s285 = scalar_lea.vmem %s0, %s284
        %s286 = smul.u32 4, %s15
      $region52: #{tpu_custom_call.1} parent=47 // pred_fallthru
        _
    $region48: #{tpu_custom_call.1} parent=5 // pred_fallthru
      _
    %p287 = scmp.le.s32.totalorder 1, %s15
    %p288 = scmp.lt.s32.totalorder %s15, 3
    %p289 = pnand %p287, %p288
    %p290 = pneg %p289
    // Predicated region
    $region53: #{tpu_custom_call.1} parent=5 // pred_check
      _
    $region54: #{tpu_custom_call.1} parent=5 // pred_check_branch
      %292 = sbr.rel (%p289) target = $region56
    $region55: #{tpu_custom_call.1} parent=5 // pred_region
      %s293 = ssub.s32 %s15, 1
      %s294 = smul.u32 4, %s20
      %p295 = scmp.lt.s32.totalorder %s294, 7
      %s296 = scalar_select %p295, %s294, 7
      %s297 = smul.addr %s296, 8
      %s298 = scalar_lea.vmem %s0, %s297
      %p299 = pneg %p41
      %p300 = pneg %p38
      %p301 = pneg %p62
      %p302 = pneg %p59
      %p303 = pneg %p83
      %p304 = pneg %p80
      %p305 = pneg %p104
      %p306 = pneg %p101
      %p307 = pneg %p125
      %p308 = pneg %p122
      %p309 = pneg %p146
      %p310 = pneg %p143
      %p311 = pneg %p167
      %p312 = pneg %p164
      %p313 = pneg %p188
      %p314 = pneg %p185
      %p315 = pneg %p209
      %p316 = pneg %p206
      %p317 = pneg %p235
      %p318 = pneg %p232
      %s319 = smul.u32 4, %s20
      %p320 = scmp.lt.s32.totalorder %s319, 7
      %s321 = scalar_select %p320, %s319, 7
      %s322 = smul.addr %s321, 8
      %s323 = scalar_lea.vmem %s9, %s322
      %s324 = smul.u32 4, %s20
      %p325 = scmp.lt.s32.totalorder %s324, 7
      %s326 = scalar_select %p325, %s324, 7
      %s327 = smul.addr %s326, 8
      %s328 = scalar_lea.vmem %s0, %s327
      %s329 = smul.u32 4, %s20
      %s330 = smul.u32 4, %s20
      %p331 = scmp.lt.s32.totalorder %s330, 7
      %s332 = scalar_select %p331, %s330, 7
      %s333 = smul.addr %s332, 8
      %s334 = scalar_lea.vmem %s9, %s333
      %s335 = smul.u32 4, %s20
      %v336 = vld [vmem:[%s328] sm:$0xff]
      %v337 = vld [vmem:[%s328 + $0x8] sm:$0xff]
      %v338 = vld [vmem:[%s328 + $0x10] sm:$0xff]
      %v339 = vld [vmem:[%s328 + $0x18] sm:$0xff]
      %v340 = vld [vmem:[%s1] sm:$0xff]
      %v341 = vld [vmem:[%s1 + $0x8] sm:$0xff]
      %v342 = vld [vmem:[%s2] sm:$0x1]
      %v344 = vlaneseq
      %v345 = vshrl.u32 %v344, 7
      %v346 = vsub.s32 0, %v345
      %v347 = vrot.slane %v342, %v346
      %vm349 = vcmask 130048
      %v351 = vsel %vm349, %v336, 0
      %v354 = vsel %vm349, %v337, 0
      %v357 = vsel %vm349, %v338, 0
      %v360 = vsel %vm349, %v339, 0
      %362 = vmatprep.subr.mxu0 0.0
      %363 = vmatpush1.msra.mxu0 %v340
      %364 = vmatprep.subr.mxu0 0.0
      %365 = vmatpush1.msra.mxu0 %v341
      %366 = vmatprep.subr.mxu0 0.0
      %367 = vmatpush1.msra.mxu0 0.0
      %368 = vmatprep.subr.mxu0 0.0
      %369 = vmatpush1.msra.mxu0 0.0
      %370 = vmatprep.subr.mxu0 0.0
      %371 = vmatpush1.msra.mxu0 0.0
      %372 = vmatprep.subr.mxu0 0.0
      %373 = vmatpush1.msra.mxu0 0.0
      %374 = vmatprep.subr.mxu0 0.0
      %375 = vmatpush1.msra.mxu0 0.0
      %376 = vmatprep.subr.mxu0 0.0
      %377 = vmatpush1.msra.mxu0 0.0
      %378 = vmatprep.subr.mxu0 0.0
      %379 = vmatpush1.msra.mxu0 0.0
      %380 = vmatprep.subr.mxu0 0.0
      %381 = vmatpush1.msra.mxu0 0.0
      %382 = vmatprep.subr.mxu0 0.0
      %383 = vmatpush1.msra.mxu0 0.0
      %384 = vmatprep.subr.mxu0 0.0
      %385 = vmatpush1.msra.mxu0 0.0
      %386 = vmatprep.subr.mxu0 0.0
      %387 = vmatpush1.msra.mxu0 0.0
      %388 = vmatprep.subr.mxu0 0.0
      %389 = vmatpush1.msra.mxu0 0.0
      %390 = vmatprep.subr.mxu0 0.0
      %391 = vmatpush1.msra.mxu0 0.0
      %392 = vmatprep.subr.mxu0 0.0
      %393 = vmatpush1.msra.mxu0 0.0
      %394 = vmatprep.subr.mxu0 0.0
      %395 = vmatpush1.msra.mxu0 0.0
      %396 = vmatprep.subr.mxu0 0.0
      %397 = vmatpush1.msra.mxu0 0.0
      %398 = vmatprep.subr.mxu0 0.0
      %399 = vmatpush1.msra.mxu0 0.0
      %400 = vmatprep.subr.mxu0 0.0
      %401 = vmatpush1.msra.mxu0 0.0
      %402 = vmatprep.subr.mxu0 0.0
      %403 = vmatpush1.msra.mxu0 0.0
      %404 = vmatprep.subr.mxu0 0.0
      %405 = vmatpush1.msra.mxu0 0.0
      %406 = vmatprep.subr.mxu0 0.0
      %407 = vmatpush1.msra.mxu0 0.0
      %408 = vmatprep.subr.mxu0 0.0
      %409 = vmatpush1.msra.mxu0 0.0
      %410 = vmatprep.subr.mxu0 0.0
      %411 = vmatpush1.msra.mxu0 0.0
      %412 = vmatprep.subr.mxu0 0.0
      %413 = vmatpush1.msra.mxu0 0.0
      %414 = vmatprep.subr.mxu0 0.0
      %415 = vmatpush1.msra.mxu0 0.0
      %416 = vmatprep.subr.mxu0 0.0
      %417 = vmatpush1.msra.mxu0 0.0
      %418 = vmatprep.subr.mxu0 0.0
      %419 = vmatpush1.msra.mxu0 0.0
      %420 = vmatprep.subr.mxu0 0.0
      %421 = vmatpush1.msra.mxu0 0.0
      %422 = vmatprep.subr.mxu0 0.0
      %423 = vmatpush1.msra.mxu0 0.0
      %424 = vmatprep.subr.mxu0 0.0
      %425 = vmatpush1.msra.mxu0 0.0
      %426 = vmatprep.mubr.f32.mxu0 0.0
      %427 = vmatmul.mubr.f32.gmra.mrb[0].mxu0 %v351
      %v428 = vpop.f32.mrb[0].mxu0
      %v429 = vadd.f32 %v347, %v428
      %v430 = vpop.f32.mrb[0].mxu0
      %431 = vmatprep.mubr.f32.mxu0 0.0
      %432 = vmatmul.mubr.f32.gmra.mrb[0].mxu0 %v354
      %v433 = vpop.f32.mrb[0].mxu0
      %v434 = vadd.f32 %v347, %v433
      %v435 = vpop.f32.mrb[0].mxu0
      %436 = vmatprep.mubr.f32.mxu0 0.0
      %437 = vmatmul.mubr.f32.gmra.mrb[0].mxu0 %v357
      %v438 = vpop.f32.mrb[0].mxu0
      %v439 = vadd.f32 %v347, %v438
      %v440 = vpop.f32.mrb[0].mxu0
      %441 = vmatprep.mubr.f32.mxu0 0.0
      %442 = vmatmul.mubr.f32.gmra.mrb[0].mxu0 %v360
      %v443 = vpop.f32.mrb[0].mxu0
      %v444 = vadd.f32 %v347, %v443
      %v445 = vpop.f32.mrb[0].mxu0
      %446 = vdwg.mxu0
      %v447 = vmul.f32 %v429, 0.1
      %v448 = vmul.f32 %v434, 0.1
      %v449 = vmul.f32 %v439, 0.1
      %v450 = vmul.f32 %v444, 0.1
      %v451 = vmax.f32 %v429, %v447
      %v452 = vmax.f32 %v434, %v448
      %v453 = vmax.f32 %v439, %v449
      %v454 = vmax.f32 %v444, %v450
      %v455 = vld [vmem:[%s3] sm:$0xff]
      %v456 = vld [vmem:[%s3 + $0x8] sm:$0xff]
      %v457 = vld [vmem:[%s3 + $0x10] sm:$0xff]
      %v458 = vld [vmem:[%s3 + $0x18] sm:$0xff]
      %v459 = vld [vmem:[%s3 + $0x20] sm:$0xff]
      %v460 = vld [vmem:[%s3 + $0x28] sm:$0xff]
      %v461 = vld [vmem:[%s3 + $0x30] sm:$0xff]
      %v462 = vld [vmem:[%s3 + $0x38] sm:$0xff]
      %v463 = vld [vmem:[%s3 + $0x40] sm:$0xff]
      %v464 = vld [vmem:[%s3 + $0x48] sm:$0xff]
      %v465 = vld [vmem:[%s3 + $0x50] sm:$0xff]
      %v466 = vld [vmem:[%s3 + $0x58] sm:$0xff]
      %v467 = vld [vmem:[%s3 + $0x60] sm:$0xff]
      %v468 = vld [vmem:[%s3 + $0x68] sm:$0xff]
      %v469 = vld [vmem:[%s3 + $0x70] sm:$0xff]
      %v470 = vld [vmem:[%s3 + $0x78] sm:$0xff]
      %v471 = vld [vmem:[%s4] sm:$0x1]
      %v473 = vlaneseq
      %v474 = vshrl.u32 %v473, 7
      %v475 = vsub.s32 0, %v474
      %v476 = vrot.slane %v471, %v475
      %478 = vmatprep.subr.mxu0 0.0
      %479 = vmatpush1.msra.mxu0 %v455
      %480 = vmatprep.subr.mxu0 0.0
      %481 = vmatpush1.msra.mxu0 %v456
      %482 = vmatprep.subr.mxu0 0.0
      %483 = vmatpush1.msra.mxu0 %v457
      %484 = vmatprep.subr.mxu0 0.0
      %485 = vmatpush1.msra.mxu0 %v458
      %486 = vmatprep.subr.mxu0 0.0
      %487 = vmatpush1.msra.mxu0 %v459
      %488 = vmatprep.subr.mxu0 0.0
      %489 = vmatpush1.msra.mxu0 %v460
      %490 = vmatprep.subr.mxu0 0.0
      %491 = vmatpush1.msra.mxu0 %v461
      %492 = vmatprep.subr.mxu0 0.0
      %493 = vmatpush1.msra.mxu0 %v462
      %494 = vmatprep.subr.mxu0 0.0
      %495 = vmatpush1.msra.mxu0 %v463
      %496 = vmatprep.subr.mxu0 0.0
      %497 = vmatpush1.msra.mxu0 %v464
      %498 = vmatprep.subr.mxu0 0.0
      %499 = vmatpush1.msra.mxu0 %v465
      %500 = vmatprep.subr.mxu0 0.0
      %501 = vmatpush1.msra.mxu0 %v466
      %502 = vmatprep.subr.mxu0 0.0
      %503 = vmatpush1.msra.mxu0 %v467
      %504 = vmatprep.subr.mxu0 0.0
      %505 = vmatpush1.msra.mxu0 %v468
      %506 = vmatprep.subr.mxu0 0.0
      %507 = vmatpush1.msra.mxu0 %v469
      %508 = vmatprep.subr.mxu0 0.0
      %509 = vmatpush1.msra.mxu0 %v470
      %510 = vmatprep.subr.mxu0 0.0
      %511 = vmatpush1.msra.mxu0 0.0
      %512 = vmatprep.subr.mxu0 0.0
      %513 = vmatpush1.msra.mxu0 0.0
      %514 = vmatprep.subr.mxu0 0.0
      %515 = vmatpush1.msra.mxu0 0.0
      %516 = vmatprep.subr.mxu0 0.0
      %517 = vmatpush1.msra.mxu0 0.0
      %518 = vmatprep.subr.mxu0 0.0
      %519 = vmatpush1.msra.mxu0 0.0
      %520 = vmatprep.subr.mxu0 0.0
      %521 = vmatpush1.msra.mxu0 0.0
      %522 = vmatprep.subr.mxu0 0.0
      %523 = vmatpush1.msra.mxu0 0.0
      %524 = vmatprep.subr.mxu0 0.0
      %525 = vmatpush1.msra.mxu0 0.0
      %526 = vmatprep.subr.mxu0 0.0
      %527 = vmatpush1.msra.mxu0 0.0
      %528 = vmatprep.subr.mxu0 0.0
      %529 = vmatpush1.msra.mxu0 0.0
      %530 = vmatprep.subr.mxu0 0.0
      %531 = vmatpush1.msra.mxu0 0.0
      %532 = vmatprep.subr.mxu0 0.0
      %533 = vmatpush1.msra.mxu0 0.0
      %534 = vmatprep.subr.mxu0 0.0
      %535 = vmatpush1.msra.mxu0 0.0
      %536 = vmatprep.subr.mxu0 0.0
      %537 = vmatpush1.msra.mxu0 0.0
      %538 = vmatprep.subr.mxu0 0.0
      %539 = vmatpush1.msra.mxu0 0.0
      %540 = vmatprep.subr.mxu0 0.0
      %541 = vmatpush1.msra.mxu0 0.0
      %542 = vmatprep.mubr.f32.mxu0 0.0
      %543 = vmatmul.mubr.f32.gmra.mrb[0].mxu0 %v451
      %v544 = vpop.f32.mrb[0].mxu0
      %v545 = vadd.f32 %v476, %v544
      %v546 = vpop.f32.mrb[0].mxu0
      %547 = vmatprep.mubr.f32.mxu0 0.0
      %548 = vmatmul.mubr.f32.gmra.mrb[0].mxu0 %v452
      %v549 = vpop.f32.mrb[0].mxu0
      %v550 = vadd.f32 %v476, %v549
      %v551 = vpop.f32.mrb[0].mxu0
      %552 = vmatprep.mubr.f32.mxu0 0.0
      %553 = vmatmul.mubr.f32.gmra.mrb[0].mxu0 %v453
      %v554 = vpop.f32.mrb[0].mxu0
      %v555 = vadd.f32 %v476, %v554
      %v556 = vpop.f32.mrb[0].mxu0
      %557 = vmatprep.mubr.f32.mxu0 0.0
      %558 = vmatmul.mubr.f32.gmra.mrb[0].mxu0 %v454
      %v559 = vpop.f32.mrb[0].mxu0
      %v560 = vadd.f32 %v476, %v559
      %v561 = vpop.f32.mrb[0].mxu0
      %562 = vdwg.mxu0
      %v563 = vmul.f32 %v545, 0.1
      %v564 = vmul.f32 %v550, 0.1
      %v565 = vmul.f32 %v555, 0.1
      %v566 = vmul.f32 %v560, 0.1
      %v567 = vmax.f32 %v545, %v563
      %v568 = vmax.f32 %v550, %v564
      %v569 = vmax.f32 %v555, %v565
      %v570 = vmax.f32 %v560, %v566
      %v571 = vld [vmem:[%s5] sm:$0xff]
      %v572 = vld [vmem:[%s5 + $0x8] sm:$0xff]
      %v573 = vld [vmem:[%s5 + $0x10] sm:$0xff]
      %v574 = vld [vmem:[%s5 + $0x18] sm:$0xff]
      %v575 = vld [vmem:[%s5 + $0x20] sm:$0xff]
      %v576 = vld [vmem:[%s5 + $0x28] sm:$0xff]
      %v577 = vld [vmem:[%s5 + $0x30] sm:$0xff]
      %v578 = vld [vmem:[%s5 + $0x38] sm:$0xff]
      %v579 = vld [vmem:[%s5 + $0x40] sm:$0xff]
      %v580 = vld [vmem:[%s5 + $0x48] sm:$0xff]
      %v581 = vld [vmem:[%s5 + $0x50] sm:$0xff]
      %v582 = vld [vmem:[%s5 + $0x58] sm:$0xff]
      %v583 = vld [vmem:[%s5 + $0x60] sm:$0xff]
      %v584 = vld [vmem:[%s5 + $0x68] sm:$0xff]
      %v585 = vld [vmem:[%s5 + $0x70] sm:$0xff]
      %v586 = vld [vmem:[%s5 + $0x78] sm:$0xff]
      %v587 = vld [vmem:[%s6] sm:$0x1]
      %v589 = vlaneseq
      %v590 = vshrl.u32 %v589, 7
      %v591 = vsub.s32 0, %v590
      %v592 = vrot.slane %v587, %v591
      %594 = vmatprep.subr.mxu0 0.0
      %595 = vmatpush1.msra.mxu0 %v571
      %596 = vmatprep.subr.mxu0 0.0
      %597 = vmatpush1.msra.mxu0 %v572
      %598 = vmatprep.subr.mxu0 0.0
      %599 = vmatpush1.msra.mxu0 %v573
      %600 = vmatprep.subr.mxu0 0.0
      %601 = vmatpush1.msra.mxu0 %v574
      %602 = vmatprep.subr.mxu0 0.0
      %603 = vmatpush1.msra.mxu0 %v575
      %604 = vmatprep.subr.mxu0 0.0
      %605 = vmatpush1.msra.mxu0 %v576
      %606 = vmatprep.subr.mxu0 0.0
      %607 = vmatpush1.msra.mxu0 %v577
      %608 = vmatprep.subr.mxu0 0.0
      %609 = vmatpush1.msra.mxu0 %v578
      %610 = vmatprep.subr.mxu0 0.0
      %611 = vmatpush1.msra.mxu0 %v579
      %612 = vmatprep.subr.mxu0 0.0
      %613 = vmatpush1.msra.mxu0 %v580
      %614 = vmatprep.subr.mxu0 0.0
      %615 = vmatpush1.msra.mxu0 %v581
      %616 = vmatprep.subr.mxu0 0.0
      %617 = vmatpush1.msra.mxu0 %v582
      %618 = vmatprep.subr.mxu0 0.0
      %619 = vmatpush1.msra.mxu0 %v583
      %620 = vmatprep.subr.mxu0 0.0
      %621 = vmatpush1.msra.mxu0 %v584
      %622 = vmatprep.subr.mxu0 0.0
      %623 = vmatpush1.msra.mxu0 %v585
      %624 = vmatprep.subr.mxu0 0.0
      %625 = vmatpush1.msra.mxu0 %v586
      %626 = vmatprep.subr.mxu0 0.0
      %627 = vmatpush1.msra.mxu0 0.0
      %628 = vmatprep.subr.mxu0 0.0
      %629 = vmatpush1.msra.mxu0 0.0
      %630 = vmatprep.subr.mxu0 0.0
      %631 = vmatpush1.msra.mxu0 0.0
      %632 = vmatprep.subr.mxu0 0.0
      %633 = vmatpush1.msra.mxu0 0.0
      %634 = vmatprep.subr.mxu0 0.0
      %635 = vmatpush1.msra.mxu0 0.0
      %636 = vmatprep.subr.mxu0 0.0
      %637 = vmatpush1.msra.mxu0 0.0
      %638 = vmatprep.subr.mxu0 0.0
      %639 = vmatpush1.msra.mxu0 0.0
      %640 = vmatprep.subr.mxu0 0.0
      %641 = vmatpush1.msra.mxu0 0.0
      %642 = vmatprep.subr.mxu0 0.0
      %643 = vmatpush1.msra.mxu0 0.0
      %644 = vmatprep.subr.mxu0 0.0
      %645 = vmatpush1.msra.mxu0 0.0
      %646 = vmatprep.subr.mxu0 0.0
      %647 = vmatpush1.msra.mxu0 0.0
      %648 = vmatprep.subr.mxu0 0.0
      %649 = vmatpush1.msra.mxu0 0.0
      %650 = vmatprep.subr.mxu0 0.0
      %651 = vmatpush1.msra.mxu0 0.0
      %652 = vmatprep.subr.mxu0 0.0
      %653 = vmatpush1.msra.mxu0 0.0
      %654 = vmatprep.subr.mxu0 0.0
      %655 = vmatpush1.msra.mxu0 0.0
      %656 = vmatprep.subr.mxu0 0.0
      %657 = vmatpush1.msra.mxu0 0.0
      %658 = vmatprep.mubr.f32.mxu0 0.0
      %659 = vmatmul.mubr.f32.gmra.mrb[0].mxu0 %v567
      %v660 = vpop.f32.mrb[0].mxu0
      %v661 = vadd.f32 %v592, %v660
      %v662 = vpop.f32.mrb[0].mxu0
      %663 = vmatprep.mubr.f32.mxu0 0.0
      %664 = vmatmul.mubr.f32.gmra.mrb[0].mxu0 %v568
      %v665 = vpop.f32.mrb[0].mxu0
      %v666 = vadd.f32 %v592, %v665
      %v667 = vpop.f32.mrb[0].mxu0
      %668 = vmatprep.mubr.f32.mxu0 0.0
      %669 = vmatmul.mubr.f32.gmra.mrb[0].mxu0 %v569
      %v670 = vpop.f32.mrb[0].mxu0
      %v671 = vadd.f32 %v592, %v670
      %v672 = vpop.f32.mrb[0].mxu0
      %673 = vmatprep.mubr.f32.mxu0 0.0
      %674 = vmatmul.mubr.f32.gmra.mrb[0].mxu0 %v570
      %v675 = vpop.f32.mrb[0].mxu0
      %v676 = vadd.f32 %v592, %v675
      %v677 = vpop.f32.mrb[0].mxu0
      %678 = vdwg.mxu0
      %v679 = vld [vmem:[%s7] sm:$0xff]
      %v680 = vld [vmem:[%s7 + $0x8] sm:$0xff]
      %v681 = vld [vmem:[%s7 + $0x10] sm:$0xff]
      %v682 = vld [vmem:[%s7 + $0x18] sm:$0xff]
      %v683 = vld [vmem:[%s7 + $0x20] sm:$0xff]
      %v684 = vld [vmem:[%s7 + $0x28] sm:$0xff]
      %v685 = vld [vmem:[%s7 + $0x30] sm:$0xff]
      %v686 = vld [vmem:[%s7 + $0x38] sm:$0xff]
      %v687 = vld [vmem:[%s7 + $0x40] sm:$0xff]
      %v688 = vld [vmem:[%s7 + $0x48] sm:$0xff]
      %v689 = vld [vmem:[%s7 + $0x50] sm:$0xff]
      %v690 = vld [vmem:[%s7 + $0x58] sm:$0xff]
      %v691 = vld [vmem:[%s7 + $0x60] sm:$0xff]
      %v692 = vld [vmem:[%s7 + $0x68] sm:$0xff]
      %v693 = vld [vmem:[%s7 + $0x70] sm:$0xff]
      %v694 = vld [vmem:[%s7 + $0x78] sm:$0xff]
      %v695 = vld [vmem:[%s8] sm:$0x1]
      %v697 = vlaneseq
      %v698 = vshrl.u32 %v697, 7
      %v699 = vsub.s32 0, %v698
      %v700 = vrot.slane %v695, %v699
      %702 = vmatprep.subr.mxu0 0.0
      %703 = vmatpush1.msra.mxu0 %v679
      %704 = vmatprep.subr.mxu0 0.0
      %705 = vmatpush1.msra.mxu0 %v680
      %706 = vmatprep.subr.mxu0 0.0
      %707 = vmatpush1.msra.mxu0 %v681
      %708 = vmatprep.subr.mxu0 0.0
      %709 = vmatpush1.msra.mxu0 %v682
      %710 = vmatprep.subr.mxu0 0.0
      %711 = vmatpush1.msra.mxu0 %v683
      %712 = vmatprep.subr.mxu0 0.0
      %713 = vmatpush1.msra.mxu0 %v684
      %714 = vmatprep.subr.mxu0 0.0
      %715 = vmatpush1.msra.mxu0 %v685
      %716 = vmatprep.subr.mxu0 0.0
      %717 = vmatpush1.msra.mxu0 %v686
      %718 = vmatprep.subr.mxu0 0.0
      %719 = vmatpush1.msra.mxu0 %v687
      %720 = vmatprep.subr.mxu0 0.0
      %721 = vmatpush1.msra.mxu0 %v688
      %722 = vmatprep.subr.mxu0 0.0
      %723 = vmatpush1.msra.mxu0 %v689
      %724 = vmatprep.subr.mxu0 0.0
      %725 = vmatpush1.msra.mxu0 %v690
      %726 = vmatprep.subr.mxu0 0.0
      %727 = vmatpush1.msra.mxu0 %v691
      %728 = vmatprep.subr.mxu0 0.0
      %729 = vmatpush1.msra.mxu0 %v692
      %730 = vmatprep.subr.mxu0 0.0
      %731 = vmatpush1.msra.mxu0 %v693
      %732 = vmatprep.subr.mxu0 0.0
      %733 = vmatpush1.msra.mxu0 %v694
      %734 = vmatprep.subr.mxu0 0.0
      %735 = vmatpush1.msra.mxu0 0.0
      %736 = vmatprep.subr.mxu0 0.0
      %737 = vmatpush1.msra.mxu0 0.0
      %738 = vmatprep.subr.mxu0 0.0
      %739 = vmatpush1.msra.mxu0 0.0
      %740 = vmatprep.subr.mxu0 0.0
      %741 = vmatpush1.msra.mxu0 0.0
      %742 = vmatprep.subr.mxu0 0.0
      %743 = vmatpush1.msra.mxu0 0.0
      %744 = vmatprep.subr.mxu0 0.0
      %745 = vmatpush1.msra.mxu0 0.0
      %746 = vmatprep.subr.mxu0 0.0
      %747 = vmatpush1.msra.mxu0 0.0
      %748 = vmatprep.subr.mxu0 0.0
      %749 = vmatpush1.msra.mxu0 0.0
      %750 = vmatprep.subr.mxu0 0.0
      %751 = vmatpush1.msra.mxu0 0.0
      %752 = vmatprep.subr.mxu0 0.0
      %753 = vmatpush1.msra.mxu0 0.0
      %754 = vmatprep.subr.mxu0 0.0
      %755 = vmatpush1.msra.mxu0 0.0
      %756 = vmatprep.subr.mxu0 0.0
      %757 = vmatpush1.msra.mxu0 0.0
      %758 = vmatprep.subr.mxu0 0.0
      %759 = vmatpush1.msra.mxu0 0.0
      %760 = vmatprep.subr.mxu0 0.0
      %761 = vmatpush1.msra.mxu0 0.0
      %762 = vmatprep.subr.mxu0 0.0
      %763 = vmatpush1.msra.mxu0 0.0
      %764 = vmatprep.subr.mxu0 0.0
      %765 = vmatpush1.msra.mxu0 0.0
      %766 = vmatprep.mubr.f32.mxu0 0.0
      %767 = vmatmul.mubr.f32.gmra.mrb[0].mxu0 %v567
      %v768 = vpop.f32.mrb[0].mxu0
      %v769 = vadd.f32 %v700, %v768
      %v770 = vpop.f32.mrb[0].mxu0
      %771 = vmatprep.mubr.f32.mxu0 0.0
      %772 = vmatmul.mubr.f32.gmra.mrb[0].mxu0 %v568
      %v773 = vpop.f32.mrb[0].mxu0
      %v774 = vadd.f32 %v700, %v773
      %v775 = vpop.f32.mrb[0].mxu0
      %776 = vmatprep.mubr.f32.mxu0 0.0
      %777 = vmatmul.mubr.f32.gmra.mrb[0].mxu0 %v569
      %v778 = vpop.f32.mrb[0].mxu0
      %v779 = vadd.f32 %v700, %v778
      %v780 = vpop.f32.mrb[0].mxu0
      %781 = vmatprep.mubr.f32.mxu0 0.0
      %782 = vmatmul.mubr.f32.gmra.mrb[0].mxu0 %v570
      %v783 = vpop.f32.mrb[0].mxu0
      %v784 = vadd.f32 %v700, %v783
      %v785 = vpop.f32.mrb[0].mxu0
      %786 = vdwg.mxu0
      %v787 = vxor.u32 %v769, 2147483648
      %v788 = vxor.u32 %v774, 2147483648
      %v789 = vxor.u32 %v779, 2147483648
      %v790 = vxor.u32 %v784, 2147483648
      %v791 = vmul.f32 %v787, 1.442695
      %v792 = vpow.pop %v791
      %v793 = vmul.f32 %v788, 1.442695
      %v794 = vpow.pop %v793
      %v795 = vmul.f32 %v789, 1.442695
      %v796 = vpow.pop %v795
      %v797 = vmul.f32 %v790, 1.442695
      %v798 = vpow.pop %v797
      %v799 = vadd.f32 %v792, 1.0
      %v800 = vadd.f32 %v794, 1.0
      %v801 = vadd.f32 %v796, 1.0
      %v802 = vadd.f32 %v798, 1.0
      %v803 = vrcp.pop %v799
      %v804 = vmul.f32 1.0, %v803
      %v805 = vrcp.pop %v800
      %v806 = vmul.f32 1.0, %v805
      %v807 = vrcp.pop %v801
      %v808 = vmul.f32 1.0, %v807
      %v809 = vrcp.pop %v802
      %v810 = vmul.f32 1.0, %v809
      %v811 = vsub.f32 %v336, %v661
      %v812 = vsub.f32 %v337, %v666
      %v813 = vsub.f32 %v338, %v671
      %v814 = vsub.f32 %v339, %v676
      %v815 = vmul.f32 %v804, %v811
      %v816 = vmul.f32 %v806, %v812
      %v817 = vmul.f32 %v808, %v813
      %v818 = vmul.f32 %v810, %v814
      %v819 = vadd.f32 %v661, %v815
      %v820 = vadd.f32 %v666, %v816
      %v821 = vadd.f32 %v671, %v817
      %v822 = vadd.f32 %v676, %v818
      %823 = vst.msk [vmem:[%s334] sm:$0xff] %vm349, %v819
      %824 = vst.msk [vmem:[%s334 + $0x8] sm:$0xff] %vm349, %v820
      %825 = vst.msk [vmem:[%s334 + $0x10] sm:$0xff] %vm349, %v821
      %826 = vst.msk [vmem:[%s334 + $0x18] sm:$0xff] %vm349, %v822
      %s827 = smul.u32 4, %s20
      %p828 = scmp.lt.s32.totalorder %s827, 7
      %s829 = scalar_select %p828, %s827, 7
      %s830 = smul.addr %s829, 8
      %s831 = scalar_lea.vmem %s9, %s830
      // Predicated region
      $region57: #{tpu_custom_call.1} parent=55 // pred_check
        %p832 = pneg %p232
      $region58: #{tpu_custom_call.1} parent=55 // pred_check_branch
        %834 = sbr.rel (%p832) target = $region60
      $region59: #{tpu_custom_call.1} parent=55 // pred_region
        %s835 = smul.u32 4, %s20
      $region60: #{tpu_custom_call.1} parent=55 // pred_fallthru
        _
    $region56: #{tpu_custom_call.1} parent=5 // pred_fallthru
      _
    %p836 = scmp.le.s32.totalorder 2, %s15
    // Predicated region
    $region61: #{tpu_custom_call.1} parent=5 // pred_check
      %p837 = pneg %p836
    $region62: #{tpu_custom_call.1} parent=5 // pred_check_branch
      %839 = sbr.rel (%p837) target = $region64
    $region63: #{tpu_custom_call.1} parent=5 // pred_region
      %s840 = ssub.s32 %s15, 2
      // Predicated region
      $region65: #{tpu_custom_call.1} parent=63 // pred_check
        %p841 = pneg %p238
      $region66: #{tpu_custom_call.1} parent=63 // pred_check_branch
        %843 = sbr.rel (%p841) target = $region68
      $region67: #{tpu_custom_call.1} parent=63 // pred_region
        %s844 = smul.u32 4, %s21
        %p845 = scmp.lt.s32.totalorder %s844, 7
        %s846 = scalar_select %p845, %s844, 7
        %s847 = smul.addr %s846, 8
        %s848 = scalar_lea.vmem %s9, %s847
      $region68: #{tpu_custom_call.1} parent=63 // pred_fallthru
        _
    $region64: #{tpu_custom_call.1} parent=5 // pred_fallthru
      _
  $region6: #{tpu_custom_call.1} parent=0 // loop_footer
    %s19 = sadd.s32 1, %s15
  $region7: #{tpu_custom_call.1} parent=0 // loop_footer_branch
    %14 = sbr.rel target = $region3
  $region8: #{tpu_custom_call.1} parent=0 // loop_exit
    _

</llo_original>
